<compile_context>
chip_gen: v7x
topology: tpu7x:2x2x1
jax: 0.10.0
libtpu: 0.0.40
codegen_flags: <defaults>
</compile_context>

<pallas_src>
import functools

import jax
import jax.numpy as jnp
from jax.experimental import pallas as pl
from jax.experimental.pallas import tpu as pltpu


def charrnn_kernel(x_ref, wih_ref, whh_ref, w12_ref, b12_ref, out_ref,
                   *, seq_len, batch):
    # Hoisted input projection: ONE batched bf16 MXU pass over all timesteps.
    # RNN bias already folded into wih via the appended ones column of x.
    pre = jnp.dot(x_ref[...], wih_ref[...],
                  preferred_element_type=jnp.float32)       # (seq*batch, hidden) f32

    whh = whh_ref[...]                                       # bf16, hoisted once
    hidden_size = whh.shape[1]
    h = jnp.zeros((batch, hidden_size), jnp.float32)         # nn.RNN default h0 = 0

    # Serial recurrence: fully unrolled; one small bf16 MXU dot + f32 add +
    # tanh per step on the critical path, h carried in vregs.  Slices into
    # `pre` are static and sublane-aligned (batch padded to 16).
    for t in range(seq_len):
        pre_t = pre[t * batch:(t + 1) * batch, :]
        h = jnp.tanh(pre_t + jnp.dot(h.astype(jnp.bfloat16), whh,
                                     preferred_element_type=jnp.float32))

    # Folded output head (h2o1 then h2o2, no nonlinearity in between): one
    # bf16 MXU pass hidden -> out_pad (lane-dense store).  Padded class
    # columns carry a -1e30 bias so they drop out of the normalizer.
    z = jnp.dot(h.astype(jnp.bfloat16), w12_ref[...],
                preferred_element_type=jnp.float32) + b12_ref[...]

    # Numerically stable LogSoftmax over dim=1 (class axis), all f32.
    m = jnp.max(z, axis=1, keepdims=True)
    lse = jnp.log(jnp.sum(jnp.exp(z - m), axis=1, keepdims=True)) + m
    out_ref[...] = z - lse


def _round_up(n, m):
    return -(-n // m) * m


def char_rnn_forward(line_tensor, params):
    """line_tensor: (seq_len, batch, input_size) f32 -> (batch, output_size) log-probs."""
    (w_ih, w_hh, b_ih, b_hh, w1, b1, w2, b2) = params
    seq_len, batch, input_size = line_tensor.shape
    hidden_size = w_ih.shape[0]
    output_size = w2.shape[0]

    # --- layout plumbing (plain JAX, outside the kernel) --------------------
    # Pad batch to a multiple of 16 (bf16 sublane packing).  Padded rows see
    # x = 0 (plus the ones/bias column) and compute harmless finite values.
    b_pad = _round_up(max(batch, 16), 16)
    if b_pad != batch:
        line_tensor = jnp.pad(line_tensor, ((0, 0), (0, b_pad - batch), (0, 0)))

    # Fold the fused RNN bias (b_ih + b_hh) into the input projection:
    # append a ones column to x and a bias row to W_ih^T; pad K to x16.
    x_flat = line_tensor.reshape(seq_len * b_pad, input_size)
    ones = jnp.ones((seq_len * b_pad, 1), jnp.float32)
    x_aug = jnp.concatenate([x_flat, ones], axis=1)                 # (seq*b_pad, K)
    wih_aug = jnp.concatenate([w_ih.T, (b_ih + b_hh).reshape(1, -1)], axis=0)
    k = input_size + 1
    k_pad = _round_up(k, 16)
    if k_pad != k:
        x_aug = jnp.pad(x_aug, ((0, 0), (0, k_pad - k)))
        wih_aug = jnp.pad(wih_aug, ((0, k_pad - k), (0, 0)))

    # Fold the two output Linears into one (hidden, out) matmul and lane-pad
    # the class axis to a multiple of 128 (lane-dense output store).
    w12 = w1.T @ w2.T                                               # (hidden, out)
    b12 = b1 @ w2.T + b2                                            # (out,)
    out_pad = _round_up(output_size, 128)
    w12_p = jnp.zeros((hidden_size, out_pad), jnp.float32).at[:, :output_size].set(w12)
    b12_p = jnp.full((1, out_pad), jnp.float32(-1e30)).at[0, :output_size].set(b12)

    # bf16 MXU operands; biases and all in-kernel elementwise math stay f32.
    args = (
        x_aug.astype(jnp.bfloat16),      # (seq*b_pad, k_pad)
        wih_aug.astype(jnp.bfloat16),    # (k_pad, hidden)
        w_hh.T.astype(jnp.bfloat16),     # (hidden, hidden)
        w12_p.astype(jnp.bfloat16),      # (hidden, out_pad)
        b12_p,                           # (1, out_pad) f32
    )

    flops = (2 * seq_len * b_pad * k_pad * hidden_size
             + seq_len * 2 * b_pad * hidden_size * hidden_size
             + 2 * b_pad * hidden_size * out_pad)
    transcendentals = seq_len * b_pad * hidden_size + b_pad * out_pad
    bytes_accessed = (sum(int(a.size) * a.dtype.itemsize for a in args)
                      + b_pad * out_pad * 4)

    vmem = pl.BlockSpec(memory_space=pltpu.MemorySpace.VMEM)
    kernel = functools.partial(charrnn_kernel, seq_len=seq_len, batch=b_pad)
    out = pl.pallas_call(
        kernel,
        out_shape=jax.ShapeDtypeStruct((b_pad, out_pad), jnp.float32),
        in_specs=[vmem] * len(args),
        out_specs=vmem,
        cost_estimate=pl.CostEstimate(flops=flops,
                                      transcendentals=transcendentals,
                                      bytes_accessed=bytes_accessed),
    )(*args)
    return out[:batch, :output_size]


def init_params(key, input_size, hidden_size, output_size):
    """PyTorch-style uniform init U(-1/sqrt(fan_in), 1/sqrt(fan_in)); deterministic."""
    def unif(k, shape, fan_in):
        bound = 1.0 / jnp.sqrt(jnp.float32(fan_in))
        return jax.random.uniform(k, shape, jnp.float32, -bound, bound)

    ks = jax.random.split(key, 8)
    w_ih = unif(ks[0], (hidden_size, input_size), hidden_size)   # rnn weight_ih_l0
    w_hh = unif(ks[1], (hidden_size, hidden_size), hidden_size)  # rnn weight_hh_l0
    b_ih = unif(ks[2], (hidden_size,), hidden_size)
    b_hh = unif(ks[3], (hidden_size,), hidden_size)
    w1 = unif(ks[4], (128, hidden_size), hidden_size)            # h2o1
    b1 = unif(ks[5], (128,), hidden_size)
    w2 = unif(ks[6], (output_size, 128), 128)                    # h2o2
    b2 = unif(ks[7], (output_size,), 128)
    return (w_ih, w_hh, b_ih, b_hh, w1, b1, w2, b2)


def reference_forward(line_tensor, params):
    """Pure-JAX f32 reference mirroring the PyTorch forward (two separate Linears)."""
    (w_ih, w_hh, b_ih, b_hh, w1, b1, w2, b2) = params
    batch = line_tensor.shape[1]
    hidden_size = w_ih.shape[0]
    h = jnp.zeros((batch, hidden_size), jnp.float32)
    for t in range(line_tensor.shape[0]):
        h = jnp.tanh(line_tensor[t] @ w_ih.T + b_ih + h @ w_hh.T + b_hh)
    z1 = h @ w1.T + b1
    z2 = z1 @ w2.T + b2
    return jax.nn.log_softmax(z2, axis=1)


if __name__ == "__main__":
    SEQ, BATCH = 8, 2
    INPUT_SIZE, HIDDEN_SIZE, OUTPUT_SIZE = 16, 32, 20

    key = jax.random.PRNGKey(0)
    k_x, k_p = jax.random.split(key)
    line_tensor = jax.random.normal(k_x, (SEQ, BATCH, INPUT_SIZE), jnp.float32)
    params = init_params(k_p, INPUT_SIZE, HIDDEN_SIZE, OUTPUT_SIZE)

    out = char_rnn_forward(line_tensor, params)
    out = jax.block_until_ready(out)

    ref = reference_forward(line_tensor, params)
    assert out.shape == (BATCH, OUTPUT_SIZE)
    # bf16 MXU operands + folded weights shift rounding vs the f32 two-matmul
    # reference; tanh saturation keeps the drift small, so a modest tolerance.
    assert jnp.allclose(out, ref, atol=2e-2, rtol=2e-2), (
        f"max abs err {jnp.max(jnp.abs(out - ref))}")
    print("KERNEL_OK")
</pallas_src>

<mosaic_0001>
module attributes {stable_mosaic.version = 11 : i64} {
  func.func @charrnn_kernel(%arg0: memref<128x32xbf16, #tpu.memory_space<vmem>>, %arg1: memref<32x32xbf16, #tpu.memory_space<vmem>>, %arg2: memref<32x32xbf16, #tpu.memory_space<vmem>>, %arg3: memref<32x128xbf16, #tpu.memory_space<vmem>>, %arg4: memref<1x128xf32, #tpu.memory_space<vmem>>, %arg5: memref<16x128xf32, #tpu.memory_space<vmem>>) attributes {dimension_semantics = [], scalar_prefetch = 0 : i64, scratch_operands = 0 : i64, tpu.core_type = #tpu.core_type<tc>} {
    %c0 = arith.constant 0 : index
    %c0_0 = arith.constant 0 : index
    %0 = vector.load %arg0[%c0, %c0_0] : memref<128x32xbf16, #tpu.memory_space<vmem>>, vector<128x32xbf16>
    %c0_1 = arith.constant 0 : index
    %c0_2 = arith.constant 0 : index
    %1 = vector.load %arg1[%c0_1, %c0_2] : memref<32x32xbf16, #tpu.memory_space<vmem>>, vector<32x32xbf16>
    %cst = arith.constant dense<0.000000e+00> : vector<128x32xf32>
    %2 = tpu.matmul %0, %1, %cst {dimension_numbers = #tpu.dot_dimension_numbers<[1], [0], [0], [1], [0, 0, 1, 1], [], []>} : vector<128x32xbf16>, vector<32x32xbf16>, vector<128x32xf32> -> vector<128x32xf32>
    %c0_3 = arith.constant 0 : index
    %c0_4 = arith.constant 0 : index
    %3 = vector.load %arg2[%c0_3, %c0_4] : memref<32x32xbf16, #tpu.memory_space<vmem>>, vector<32x32xbf16>
    %cst_5 = arith.constant 0.000000e+00 : f32
    %4 = vector.broadcast %cst_5 : f32 to vector<16x32xf32>
    %5 = vector.extract_strided_slice %2 {offsets = [0, 0], sizes = [16, 32], strides = [1, 1]} : vector<128x32xf32> to vector<16x32xf32>
    %6 = arith.truncf %4 : vector<16x32xf32> to vector<16x32xbf16>
    %cst_6 = arith.constant dense<0.000000e+00> : vector<16x32xf32>
    %7 = tpu.matmul %6, %3, %cst_6 {dimension_numbers = #tpu.dot_dimension_numbers<[1], [0], [0], [1], [0, 0, 1, 1], [], []>} : vector<16x32xbf16>, vector<32x32xbf16>, vector<16x32xf32> -> vector<16x32xf32>
    %8 = arith.addf %5, %7 : vector<16x32xf32>
    %9 = math.tanh %8 : vector<16x32xf32>
    %10 = vector.extract_strided_slice %2 {offsets = [16, 0], sizes = [16, 32], strides = [1, 1]} : vector<128x32xf32> to vector<16x32xf32>
    %11 = arith.truncf %9 : vector<16x32xf32> to vector<16x32xbf16>
    %cst_7 = arith.constant dense<0.000000e+00> : vector<16x32xf32>
    %12 = tpu.matmul %11, %3, %cst_7 {dimension_numbers = #tpu.dot_dimension_numbers<[1], [0], [0], [1], [0, 0, 1, 1], [], []>} : vector<16x32xbf16>, vector<32x32xbf16>, vector<16x32xf32> -> vector<16x32xf32>
    %13 = arith.addf %10, %12 : vector<16x32xf32>
    %14 = math.tanh %13 : vector<16x32xf32>
    %15 = vector.extract_strided_slice %2 {offsets = [32, 0], sizes = [16, 32], strides = [1, 1]} : vector<128x32xf32> to vector<16x32xf32>
    %16 = arith.truncf %14 : vector<16x32xf32> to vector<16x32xbf16>
    %cst_8 = arith.constant dense<0.000000e+00> : vector<16x32xf32>
    %17 = tpu.matmul %16, %3, %cst_8 {dimension_numbers = #tpu.dot_dimension_numbers<[1], [0], [0], [1], [0, 0, 1, 1], [], []>} : vector<16x32xbf16>, vector<32x32xbf16>, vector<16x32xf32> -> vector<16x32xf32>
    %18 = arith.addf %15, %17 : vector<16x32xf32>
    %19 = math.tanh %18 : vector<16x32xf32>
    %20 = vector.extract_strided_slice %2 {offsets = [48, 0], sizes = [16, 32], strides = [1, 1]} : vector<128x32xf32> to vector<16x32xf32>
    %21 = arith.truncf %19 : vector<16x32xf32> to vector<16x32xbf16>
    %cst_9 = arith.constant dense<0.000000e+00> : vector<16x32xf32>
    %22 = tpu.matmul %21, %3, %cst_9 {dimension_numbers = #tpu.dot_dimension_numbers<[1], [0], [0], [1], [0, 0, 1, 1], [], []>} : vector<16x32xbf16>, vector<32x32xbf16>, vector<16x32xf32> -> vector<16x32xf32>
    %23 = arith.addf %20, %22 : vector<16x32xf32>
    %24 = math.tanh %23 : vector<16x32xf32>
    %25 = vector.extract_strided_slice %2 {offsets = [64, 0], sizes = [16, 32], strides = [1, 1]} : vector<128x32xf32> to vector<16x32xf32>
    %26 = arith.truncf %24 : vector<16x32xf32> to vector<16x32xbf16>
    %cst_10 = arith.constant dense<0.000000e+00> : vector<16x32xf32>
    %27 = tpu.matmul %26, %3, %cst_10 {dimension_numbers = #tpu.dot_dimension_numbers<[1], [0], [0], [1], [0, 0, 1, 1], [], []>} : vector<16x32xbf16>, vector<32x32xbf16>, vector<16x32xf32> -> vector<16x32xf32>
    %28 = arith.addf %25, %27 : vector<16x32xf32>
    %29 = math.tanh %28 : vector<16x32xf32>
    %30 = vector.extract_strided_slice %2 {offsets = [80, 0], sizes = [16, 32], strides = [1, 1]} : vector<128x32xf32> to vector<16x32xf32>
    %31 = arith.truncf %29 : vector<16x32xf32> to vector<16x32xbf16>
    %cst_11 = arith.constant dense<0.000000e+00> : vector<16x32xf32>
    %32 = tpu.matmul %31, %3, %cst_11 {dimension_numbers = #tpu.dot_dimension_numbers<[1], [0], [0], [1], [0, 0, 1, 1], [], []>} : vector<16x32xbf16>, vector<32x32xbf16>, vector<16x32xf32> -> vector<16x32xf32>
    %33 = arith.addf %30, %32 : vector<16x32xf32>
    %34 = math.tanh %33 : vector<16x32xf32>
    %35 = vector.extract_strided_slice %2 {offsets = [96, 0], sizes = [16, 32], strides = [1, 1]} : vector<128x32xf32> to vector<16x32xf32>
    %36 = arith.truncf %34 : vector<16x32xf32> to vector<16x32xbf16>
    %cst_12 = arith.constant dense<0.000000e+00> : vector<16x32xf32>
    %37 = tpu.matmul %36, %3, %cst_12 {dimension_numbers = #tpu.dot_dimension_numbers<[1], [0], [0], [1], [0, 0, 1, 1], [], []>} : vector<16x32xbf16>, vector<32x32xbf16>, vector<16x32xf32> -> vector<16x32xf32>
    %38 = arith.addf %35, %37 : vector<16x32xf32>
    %39 = math.tanh %38 : vector<16x32xf32>
    %40 = vector.extract_strided_slice %2 {offsets = [112, 0], sizes = [16, 32], strides = [1, 1]} : vector<128x32xf32> to vector<16x32xf32>
    %41 = arith.truncf %39 : vector<16x32xf32> to vector<16x32xbf16>
    %cst_13 = arith.constant dense<0.000000e+00> : vector<16x32xf32>
    %42 = tpu.matmul %41, %3, %cst_13 {dimension_numbers = #tpu.dot_dimension_numbers<[1], [0], [0], [1], [0, 0, 1, 1], [], []>} : vector<16x32xbf16>, vector<32x32xbf16>, vector<16x32xf32> -> vector<16x32xf32>
    %43 = arith.addf %40, %42 : vector<16x32xf32>
    %44 = math.tanh %43 : vector<16x32xf32>
    %45 = arith.truncf %44 : vector<16x32xf32> to vector<16x32xbf16>
    %c0_14 = arith.constant 0 : index
    %c0_15 = arith.constant 0 : index
    %46 = vector.load %arg3[%c0_14, %c0_15] : memref<32x128xbf16, #tpu.memory_space<vmem>>, vector<32x128xbf16>
    %cst_16 = arith.constant dense<0.000000e+00> : vector<16x128xf32>
    %47 = tpu.matmul %45, %46, %cst_16 {dimension_numbers = #tpu.dot_dimension_numbers<[1], [0], [0], [1], [0, 0, 1, 1], [], []>} : vector<16x32xbf16>, vector<32x128xbf16>, vector<16x128xf32> -> vector<16x128xf32>
    %c0_17 = arith.constant 0 : index
    %c0_18 = arith.constant 0 : index
    %48 = vector.load %arg4[%c0_17, %c0_18] : memref<1x128xf32, #tpu.memory_space<vmem>>, vector<1x128xf32>
    %49 = vector.broadcast %48 : vector<1x128xf32> to vector<16x128xf32>
    %50 = arith.addf %47, %49 : vector<16x128xf32>
    %cst_19 = arith.constant dense<0xFF800000> : vector<16xf32>
    %51 = vector.multi_reduction <maximumf>, %50, %cst_19 [1] : vector<16x128xf32> to vector<16xf32>
    %52 = vector.shape_cast %51 : vector<16xf32> to vector<16x1xf32>
    %53 = vector.broadcast %52 : vector<16x1xf32> to vector<16x128xf32>
    %54 = arith.subf %50, %53 : vector<16x128xf32>
    %55 = math.exp %54 : vector<16x128xf32>
    %cst_20 = arith.constant dense<0.000000e+00> : vector<16xf32>
    %56 = vector.multi_reduction <add>, %55, %cst_20 [1] : vector<16x128xf32> to vector<16xf32>
    %57 = vector.shape_cast %56 : vector<16xf32> to vector<16x1xf32>
    %58 = math.log %57 : vector<16x1xf32>
    %59 = arith.addf %58, %52 : vector<16x1xf32>
    %60 = vector.broadcast %59 : vector<16x1xf32> to vector<16x128xf32>
    %61 = arith.subf %50, %60 : vector<16x128xf32>
    %c0_21 = arith.constant 0 : index
    %c0_22 = arith.constant 0 : index
    %62 = vector.load %arg5[%c0_21, %c0_22] : memref<16x128xf32, #tpu.memory_space<vmem>>, vector<16x128xf32>
    tpu.vector_store %arg5[%c0_21, %c0_22], %61 {strides = array<i32>} : memref<16x128xf32, #tpu.memory_space<vmem>>, vector<16x128xf32>,
    return
  }
}

</mosaic_0001>

<llo_original>
// kernel: tpu_custom_call.1
$region0: #{tpu_custom_call.1}
  #allocation0 [shape = 'u32[]', space=smem, size = 0x4, offset = 0x4, fixed_abs, tag = 'smem constant byte address 0x4 - core index']
  #allocation1 [shape = 'u32[144,128]{1,0:T(1,128)}', space=vmem, size = 0x12000, scoped, tag = 'internal scratch']
  %s0 = inlined_call_operand.vmem [shape: bf16[128,32], index: 0, kind: input, shape index: {}]
  %s1 = inlined_call_operand.vmem [shape: bf16[32,32], index: 1, kind: input, shape index: {}]
  %s2 = inlined_call_operand.vmem [shape: bf16[32,32], index: 2, kind: input, shape index: {}]
  %s3 = inlined_call_operand.vmem [shape: bf16[32,128], index: 3, kind: input, shape index: {}]
  %s4 = inlined_call_operand.vmem [shape: f32[1,128], index: 4, kind: input, shape index: {}]
  %s5 = inlined_call_operand.hbm [shape: f32[16,128], index: 5, kind: output, shape index: {}]
  %s6 = sld [smem:[#allocation0]]
  $region30: #{tpu_custom_call.1} parent=0
    _
  %s8 = ssub.s32 1, %s6
  %s9 = scalar_select 0, %s8, %s6
  $region1: #{tpu_custom_call.1} parent=0
    #allocation2 [shape = 'u8[8192]{0}', space=vmem, size = 0x2000, scoped, tag = 'output window, operand 0, single buffered']
    #allocation3 [shape = 's32[1]{0}', space=sflag, size = 0x4, scoped, tag = 'scoped memory for tpu_custom_call.1']
    %10 = vsyncpa [#allocation3], 0
    // Predicated region
    $region2: #{tpu_custom_call.1} parent=1 // pred_check
      _
    $region3: #{tpu_custom_call.1} parent=1 // pred_check_branch
      %12 = sbr.rel (0) target = $region5
    $region4: #{tpu_custom_call.1} parent=1 // pred_region
      _
    $region5: #{tpu_custom_call.1} parent=1 // pred_fallthru
      _
    // Predicated region
    $region6: #{tpu_custom_call.1} parent=1 // pred_check
      _
    $region7: #{tpu_custom_call.1} parent=1 // pred_check_branch
      %14 = sbr.rel (0) target = $region9
    $region8: #{tpu_custom_call.1} parent=1 // pred_region
      _
    $region9: #{tpu_custom_call.1} parent=1 // pred_fallthru
      _
    // Predicated region
    $region10: #{tpu_custom_call.1} parent=1 // pred_check
      _
    $region11: #{tpu_custom_call.1} parent=1 // pred_check_branch
      %16 = sbr.rel (0) target = $region13
    $region12: #{tpu_custom_call.1} parent=1 // pred_region
      _
    $region13: #{tpu_custom_call.1} parent=1 // pred_fallthru
      _
    // Predicated region
    $region14: #{tpu_custom_call.1} parent=1 // pred_check
      _
    $region15: #{tpu_custom_call.1} parent=1 // pred_check_branch
      %18 = sbr.rel (0) target = $region17
    $region16: #{tpu_custom_call.1} parent=1 // pred_region
      _
    $region17: #{tpu_custom_call.1} parent=1 // pred_fallthru
      _
    // Predicated region
    $region18: #{tpu_custom_call.1} parent=1 // pred_check
      _
    $region19: #{tpu_custom_call.1} parent=1 // pred_check_branch
      %20 = sbr.rel (0) target = $region21
    $region20: #{tpu_custom_call.1} parent=1 // pred_region
      _
    $region21: #{tpu_custom_call.1} parent=1 // pred_fallthru
      _
    %v22 = vld [vmem:[%s0] sm:$0xf]
    %v23 = vld [vmem:[%s0 + $0x4] sm:$0xf]
    %v24 = vld [vmem:[%s0 + $0x8] sm:$0xf]
    %v25 = vld [vmem:[%s0 + $0xc] sm:$0xf]
    %v26 = vld [vmem:[%s0 + $0x10] sm:$0xf]
    %v27 = vld [vmem:[%s0 + $0x14] sm:$0xf]
    %v28 = vld [vmem:[%s0 + $0x18] sm:$0xf]
    %v29 = vld [vmem:[%s0 + $0x1c] sm:$0xf]
    %v30 = vld [vmem:[%s0 + $0x20] sm:$0xf]
    %v31 = vld [vmem:[%s0 + $0x24] sm:$0xf]
    %v32 = vld [vmem:[%s0 + $0x28] sm:$0xf]
    %v33 = vld [vmem:[%s0 + $0x2c] sm:$0xf]
    %v34 = vld [vmem:[%s0 + $0x30] sm:$0xf]
    %v35 = vld [vmem:[%s0 + $0x34] sm:$0xf]
    %v36 = vld [vmem:[%s0 + $0x38] sm:$0xf]
    %v37 = vld [vmem:[%s0 + $0x3c] sm:$0xf]
    %v38 = vld [vmem:[%s1] sm:$0xf]
    %v39 = vld [vmem:[%s1 + $0x4] sm:$0xf]
    %v40 = vld [vmem:[%s1 + $0x8] sm:$0xf]
    %v41 = vld [vmem:[%s1 + $0xc] sm:$0xf]
    %v58 = vunpack.c.l.b16 %v22
    %v59 = vunpack.c.l.b16 %v23
    %v60 = vunpack.c.l.b16 %v24
    %v61 = vunpack.c.l.b16 %v25
    %v62 = vunpack.c.l.b16 %v26
    %v63 = vunpack.c.l.b16 %v27
    %v64 = vunpack.c.l.b16 %v28
    %v65 = vunpack.c.l.b16 %v29
    %v66 = vunpack.c.l.b16 %v30
    %v67 = vunpack.c.l.b16 %v31
    %v68 = vunpack.c.l.b16 %v32
    %v69 = vunpack.c.l.b16 %v33
    %v70 = vunpack.c.l.b16 %v34
    %v71 = vunpack.c.l.b16 %v35
    %v72 = vunpack.c.l.b16 %v36
    %v73 = vunpack.c.l.b16 %v37
    %v74 = vpack.c.b16 %v59, %v58
    %v75 = vpack.c.b16 %v61, %v60
    %v76 = vpack.c.b16 %v63, %v62
    %v77 = vpack.c.b16 %v65, %v64
    %v78 = vpack.c.b16 %v67, %v66
    %v79 = vpack.c.b16 %v69, %v68
    %v80 = vpack.c.b16 %v71, %v70
    %v81 = vpack.c.b16 %v73, %v72
    %v86 = vunpack.c.l.b16 %v38
    %v87 = vunpack.c.l.b16 %v39
    %v88 = vunpack.c.l.b16 %v40
    %v89 = vunpack.c.l.b16 %v41
    %v90 = vpack.c.b16 %v87, %v86
    %v91 = vpack.c.b16 %v89, %v88
    %vm94 = vcmask 261120
    %v96 = vsel %vm94, %v74, 0
    %v99 = vsel %vm94, %v75, 0
    %v102 = vsel %vm94, %v76, 0
    %v105 = vsel %vm94, %v77, 0
    %v108 = vsel %vm94, %v78, 0
    %v111 = vsel %vm94, %v79, 0
    %v114 = vsel %vm94, %v80, 0
    %v117 = vsel %vm94, %v81, 0
    %119 = vmatprep.subr.bf16.mxu0 0
    %120 = vmatpush1.bf16.msra.mxu0 %v90
    %121 = vmatprep.subr.bf16.mxu0 0
    %122 = vmatpush1.bf16.msra.mxu0 %v91
    %123 = vmatprep.subr.bf16.mxu0 0
    %124 = vmatpush1.bf16.msra.mxu0 0
    %125 = vmatprep.subr.bf16.mxu0 0
    %126 = vmatpush1.bf16.msra.mxu0 0
    %127 = vmatprep.subr.bf16.mxu0 0
    %128 = vmatpush1.bf16.msra.mxu0 0
    %129 = vmatprep.subr.bf16.mxu0 0
    %130 = vmatpush1.bf16.msra.mxu0 0
    %131 = vmatprep.subr.bf16.mxu0 0
    %132 = vmatpush1.bf16.msra.mxu0 0
    %133 = vmatprep.subr.bf16.mxu0 0
    %134 = vmatpush1.bf16.msra.mxu0 0
    %135 = vmatprep.subr.bf16.mxu0 0
    %136 = vmatpush1.bf16.msra.mxu0 0
    %137 = vmatprep.subr.bf16.mxu0 0
    %138 = vmatpush1.bf16.msra.mxu0 0
    %139 = vmatprep.subr.bf16.mxu0 0
    %140 = vmatpush1.bf16.msra.mxu0 0
    %141 = vmatprep.subr.bf16.mxu0 0
    %142 = vmatpush1.bf16.msra.mxu0 0
    %143 = vmatprep.subr.bf16.mxu0 0
    %144 = vmatpush1.bf16.msra.mxu0 0
    %145 = vmatprep.subr.bf16.mxu0 0
    %146 = vmatpush1.bf16.msra.mxu0 0
    %147 = vmatprep.subr.bf16.mxu0 0
    %148 = vmatpush1.bf16.msra.mxu0 0
    %149 = vmatprep.subr.bf16.mxu0 0
    %150 = vmatpush1.bf16.msra.mxu0 0
    %151 = vmatprep.mubr.bf16.mxu0 0
    %152 = vmatmul.mubr.bf16.gmra.mrb[0].mxu0 %v96
    %v153 = vpop.f32.mrb[0].mxu0
    %v154 = vadd.f32 0.0, %v153
    %v155 = vpop.f32.mrb[0].mxu0
    %v156 = vpop.f32.mrb[0].mxu0
    %v157 = vadd.f32 0.0, %v156
    %v158 = vpop.f32.mrb[0].mxu0
    %159 = vmatprep.mubr.bf16.mxu0 0
    %160 = vmatmul.mubr.bf16.gmra.mrb[0].mxu0 %v99
    %v161 = vpop.f32.mrb[0].mxu0
    %v162 = vadd.f32 0.0, %v161
    %v163 = vpop.f32.mrb[0].mxu0
    %v164 = vpop.f32.mrb[0].mxu0
    %v165 = vadd.f32 0.0, %v164
    %v166 = vpop.f32.mrb[0].mxu0
    %167 = vmatprep.mubr.bf16.mxu0 0
    %168 = vmatmul.mubr.bf16.gmra.mrb[0].mxu0 %v102
    %v169 = vpop.f32.mrb[0].mxu0
    %v170 = vadd.f32 0.0, %v169
    %v171 = vpop.f32.mrb[0].mxu0
    %v172 = vpop.f32.mrb[0].mxu0
    %v173 = vadd.f32 0.0, %v172
    %v174 = vpop.f32.mrb[0].mxu0
    %175 = vmatprep.mubr.bf16.mxu0 0
    %176 = vmatmul.mubr.bf16.gmra.mrb[0].mxu0 %v105
    %v177 = vpop.f32.mrb[0].mxu0
    %v178 = vadd.f32 0.0, %v177
    %v179 = vpop.f32.mrb[0].mxu0
    %v180 = vpop.f32.mrb[0].mxu0
    %v181 = vadd.f32 0.0, %v180
    %v182 = vpop.f32.mrb[0].mxu0
    %183 = vmatprep.mubr.bf16.mxu0 0
    %184 = vmatmul.mubr.bf16.gmra.mrb[0].mxu0 %v108
    %v185 = vpop.f32.mrb[0].mxu0
    %v186 = vadd.f32 0.0, %v185
    %v187 = vpop.f32.mrb[0].mxu0
    %v188 = vpop.f32.mrb[0].mxu0
    %v189 = vadd.f32 0.0, %v188
    %v190 = vpop.f32.mrb[0].mxu0
    %191 = vmatprep.mubr.bf16.mxu0 0
    %192 = vmatmul.mubr.bf16.gmra.mrb[0].mxu0 %v111
    %v193 = vpop.f32.mrb[0].mxu0
    %v194 = vadd.f32 0.0, %v193
    %v195 = vpop.f32.mrb[0].mxu0
    %v196 = vpop.f32.mrb[0].mxu0
    %v197 = vadd.f32 0.0, %v196
    %v198 = vpop.f32.mrb[0].mxu0
    %199 = vmatprep.mubr.bf16.mxu0 0
    %200 = vmatmul.mubr.bf16.gmra.mrb[0].mxu0 %v114
    %v201 = vpop.f32.mrb[0].mxu0
    %v202 = vadd.f32 0.0, %v201
    %v203 = vpop.f32.mrb[0].mxu0
    %v204 = vpop.f32.mrb[0].mxu0
    %v205 = vadd.f32 0.0, %v204
    %v206 = vpop.f32.mrb[0].mxu0
    %207 = vmatprep.mubr.bf16.mxu0 0
    %208 = vmatmul.mubr.bf16.gmra.mrb[0].mxu0 %v117
    %v209 = vpop.f32.mrb[0].mxu0
    %v210 = vadd.f32 0.0, %v209
    %v211 = vpop.f32.mrb[0].mxu0
    %v212 = vpop.f32.mrb[0].mxu0
    %v213 = vadd.f32 0.0, %v212
    %v214 = vpop.f32.mrb[0].mxu0
    %215 = vdwg.mxu0
    %v216 = vld [vmem:[%s2] sm:$0xf]
    %v217 = vld [vmem:[%s2 + $0x4] sm:$0xf]
    %v218 = vld [vmem:[%s2 + $0x8] sm:$0xf]
    %v219 = vld [vmem:[%s2 + $0xc] sm:$0xf]
    %v224 = vunpack.c.l.b16 %v216
    %v225 = vunpack.c.l.b16 %v217
    %v226 = vunpack.c.l.b16 %v218
    %v227 = vunpack.c.l.b16 %v219
    %v228 = vpack.c.b16 %v225, %v224
    %v229 = vpack.c.b16 %v227, %v226
    %v233 = vsel %vm94, 0, 0
    %235 = vmatprep.subr.bf16.mxu0 0
    %236 = vmatpush1.bf16.msra.mxu0 %v228
    %237 = vmatprep.subr.bf16.mxu0 0
    %238 = vmatpush1.bf16.msra.mxu0 %v229
    %239 = vmatprep.subr.bf16.mxu0 0
    %240 = vmatpush1.bf16.msra.mxu0 0
    %241 = vmatprep.subr.bf16.mxu0 0
    %242 = vmatpush1.bf16.msra.mxu0 0
    %243 = vmatprep.subr.bf16.mxu0 0
    %244 = vmatpush1.bf16.msra.mxu0 0
    %245 = vmatprep.subr.bf16.mxu0 0
    %246 = vmatpush1.bf16.msra.mxu0 0
    %247 = vmatprep.subr.bf16.mxu0 0
    %248 = vmatpush1.bf16.msra.mxu0 0
    %249 = vmatprep.subr.bf16.mxu0 0
    %250 = vmatpush1.bf16.msra.mxu0 0
    %251 = vmatprep.subr.bf16.mxu0 0
    %252 = vmatpush1.bf16.msra.mxu0 0
    %253 = vmatprep.subr.bf16.mxu0 0
    %254 = vmatpush1.bf16.msra.mxu0 0
    %255 = vmatprep.subr.bf16.mxu0 0
    %256 = vmatpush1.bf16.msra.mxu0 0
    %257 = vmatprep.subr.bf16.mxu0 0
    %258 = vmatpush1.bf16.msra.mxu0 0
    %259 = vmatprep.subr.bf16.mxu0 0
    %260 = vmatpush1.bf16.msra.mxu0 0
    %261 = vmatprep.subr.bf16.mxu0 0
    %262 = vmatpush1.bf16.msra.mxu0 0
    %263 = vmatprep.subr.bf16.mxu0 0
    %264 = vmatpush1.bf16.msra.mxu0 0
    %265 = vmatprep.subr.bf16.mxu0 0
    %266 = vmatpush1.bf16.msra.mxu0 0
    %267 = vmatprep.mubr.bf16.mxu0 0
    %268 = vmatmul.mubr.bf16.gmra.mrb[0].mxu0 %v233
    %v269 = vpop.f32.mrb[0].mxu0
    %v270 = vadd.f32 0.0, %v269
    %v271 = vpop.f32.mrb[0].mxu0
    %v272 = vpop.f32.mrb[0].mxu0
    %v273 = vadd.f32 0.0, %v272
    %v274 = vpop.f32.mrb[0].mxu0
    %275 = vdwg.mxu0
    %v276 = vadd.f32 %v154, %v270
    %v277 = vadd.f32 %v157, %v273
    %v278 = vtanh.pop %v276
    %v279 = vtanh.pop %v277
    %v280 = vpack.c.bf16 %v279, %v278
    %v282 = vsel %vm94, %v280, 0
    %284 = vmatprep.subr.bf16.mxu0 0
    %285 = vmatpush1.bf16.msra.mxu0 %v228
    %286 = vmatprep.subr.bf16.mxu0 0
    %287 = vmatpush1.bf16.msra.mxu0 %v229
    %288 = vmatprep.subr.bf16.mxu0 0
    %289 = vmatpush1.bf16.msra.mxu0 0
    %290 = vmatprep.subr.bf16.mxu0 0
    %291 = vmatpush1.bf16.msra.mxu0 0
    %292 = vmatprep.subr.bf16.mxu0 0
    %293 = vmatpush1.bf16.msra.mxu0 0
    %294 = vmatprep.subr.bf16.mxu0 0
    %295 = vmatpush1.bf16.msra.mxu0 0
    %296 = vmatprep.subr.bf16.mxu0 0
    %297 = vmatpush1.bf16.msra.mxu0 0
    %298 = vmatprep.subr.bf16.mxu0 0
    %299 = vmatpush1.bf16.msra.mxu0 0
    %300 = vmatprep.subr.bf16.mxu0 0
    %301 = vmatpush1.bf16.msra.mxu0 0
    %302 = vmatprep.subr.bf16.mxu0 0
    %303 = vmatpush1.bf16.msra.mxu0 0
    %304 = vmatprep.subr.bf16.mxu0 0
    %305 = vmatpush1.bf16.msra.mxu0 0
    %306 = vmatprep.subr.bf16.mxu0 0
    %307 = vmatpush1.bf16.msra.mxu0 0
    %308 = vmatprep.subr.bf16.mxu0 0
    %309 = vmatpush1.bf16.msra.mxu0 0
    %310 = vmatprep.subr.bf16.mxu0 0
    %311 = vmatpush1.bf16.msra.mxu0 0
    %312 = vmatprep.subr.bf16.mxu0 0
    %313 = vmatpush1.bf16.msra.mxu0 0
    %314 = vmatprep.subr.bf16.mxu0 0
    %315 = vmatpush1.bf16.msra.mxu0 0
    %316 = vmatprep.mubr.bf16.mxu0 0
    %317 = vmatmul.mubr.bf16.gmra.mrb[0].mxu0 %v282
    %v318 = vpop.f32.mrb[0].mxu0
    %v319 = vadd.f32 0.0, %v318
    %v320 = vpop.f32.mrb[0].mxu0
    %v321 = vpop.f32.mrb[0].mxu0
    %v322 = vadd.f32 0.0, %v321
    %v323 = vpop.f32.mrb[0].mxu0
    %324 = vdwg.mxu0
    %v325 = vadd.f32 %v162, %v319
    %v326 = vadd.f32 %v165, %v322
    %v327 = vtanh.pop %v325
    %v328 = vtanh.pop %v326
    %v329 = vpack.c.bf16 %v328, %v327
    %v331 = vsel %vm94, %v329, 0
    %333 = vmatprep.subr.bf16.mxu0 0
    %334 = vmatpush1.bf16.msra.mxu0 %v228
    %335 = vmatprep.subr.bf16.mxu0 0
    %336 = vmatpush1.bf16.msra.mxu0 %v229
    %337 = vmatprep.subr.bf16.mxu0 0
    %338 = vmatpush1.bf16.msra.mxu0 0
    %339 = vmatprep.subr.bf16.mxu0 0
    %340 = vmatpush1.bf16.msra.mxu0 0
    %341 = vmatprep.subr.bf16.mxu0 0
    %342 = vmatpush1.bf16.msra.mxu0 0
    %343 = vmatprep.subr.bf16.mxu0 0
    %344 = vmatpush1.bf16.msra.mxu0 0
    %345 = vmatprep.subr.bf16.mxu0 0
    %346 = vmatpush1.bf16.msra.mxu0 0
    %347 = vmatprep.subr.bf16.mxu0 0
    %348 = vmatpush1.bf16.msra.mxu0 0
    %349 = vmatprep.subr.bf16.mxu0 0
    %350 = vmatpush1.bf16.msra.mxu0 0
    %351 = vmatprep.subr.bf16.mxu0 0
    %352 = vmatpush1.bf16.msra.mxu0 0
    %353 = vmatprep.subr.bf16.mxu0 0
    %354 = vmatpush1.bf16.msra.mxu0 0
    %355 = vmatprep.subr.bf16.mxu0 0
    %356 = vmatpush1.bf16.msra.mxu0 0
    %357 = vmatprep.subr.bf16.mxu0 0
    %358 = vmatpush1.bf16.msra.mxu0 0
    %359 = vmatprep.subr.bf16.mxu0 0
    %360 = vmatpush1.bf16.msra.mxu0 0
    %361 = vmatprep.subr.bf16.mxu0 0
    %362 = vmatpush1.bf16.msra.mxu0 0
    %363 = vmatprep.subr.bf16.mxu0 0
    %364 = vmatpush1.bf16.msra.mxu0 0
    %365 = vmatprep.mubr.bf16.mxu0 0
    %366 = vmatmul.mubr.bf16.gmra.mrb[0].mxu0 %v331
    %v367 = vpop.f32.mrb[0].mxu0
    %v368 = vadd.f32 0.0, %v367
    %v369 = vpop.f32.mrb[0].mxu0
    %v370 = vpop.f32.mrb[0].mxu0
    %v371 = vadd.f32 0.0, %v370
    %v372 = vpop.f32.mrb[0].mxu0
    %373 = vdwg.mxu0
    %v374 = vadd.f32 %v170, %v368
    %v375 = vadd.f32 %v173, %v371
    %v376 = vtanh.pop %v374
    %v377 = vtanh.pop %v375
    %v378 = vpack.c.bf16 %v377, %v376
    %v380 = vsel %vm94, %v378, 0
    %382 = vmatprep.subr.bf16.mxu0 0
    %383 = vmatpush1.bf16.msra.mxu0 %v228
    %384 = vmatprep.subr.bf16.mxu0 0
    %385 = vmatpush1.bf16.msra.mxu0 %v229
    %386 = vmatprep.subr.bf16.mxu0 0
    %387 = vmatpush1.bf16.msra.mxu0 0
    %388 = vmatprep.subr.bf16.mxu0 0
    %389 = vmatpush1.bf16.msra.mxu0 0
    %390 = vmatprep.subr.bf16.mxu0 0
    %391 = vmatpush1.bf16.msra.mxu0 0
    %392 = vmatprep.subr.bf16.mxu0 0
    %393 = vmatpush1.bf16.msra.mxu0 0
    %394 = vmatprep.subr.bf16.mxu0 0
    %395 = vmatpush1.bf16.msra.mxu0 0
    %396 = vmatprep.subr.bf16.mxu0 0
    %397 = vmatpush1.bf16.msra.mxu0 0
    %398 = vmatprep.subr.bf16.mxu0 0
    %399 = vmatpush1.bf16.msra.mxu0 0
    %400 = vmatprep.subr.bf16.mxu0 0
    %401 = vmatpush1.bf16.msra.mxu0 0
    %402 = vmatprep.subr.bf16.mxu0 0
    %403 = vmatpush1.bf16.msra.mxu0 0
    %404 = vmatprep.subr.bf16.mxu0 0
    %405 = vmatpush1.bf16.msra.mxu0 0
    %406 = vmatprep.subr.bf16.mxu0 0
    %407 = vmatpush1.bf16.msra.mxu0 0
    %408 = vmatprep.subr.bf16.mxu0 0
    %409 = vmatpush1.bf16.msra.mxu0 0
    %410 = vmatprep.subr.bf16.mxu0 0
    %411 = vmatpush1.bf16.msra.mxu0 0
    %412 = vmatprep.subr.bf16.mxu0 0
    %413 = vmatpush1.bf16.msra.mxu0 0
    %414 = vmatprep.mubr.bf16.mxu0 0
    %415 = vmatmul.mubr.bf16.gmra.mrb[0].mxu0 %v380
    %v416 = vpop.f32.mrb[0].mxu0
    %v417 = vadd.f32 0.0, %v416
    %v418 = vpop.f32.mrb[0].mxu0
    %v419 = vpop.f32.mrb[0].mxu0
    %v420 = vadd.f32 0.0, %v419
    %v421 = vpop.f32.mrb[0].mxu0
    %422 = vdwg.mxu0
    %v423 = vadd.f32 %v178, %v417
    %v424 = vadd.f32 %v181, %v420
    %v425 = vtanh.pop %v423
    %v426 = vtanh.pop %v424
    %v427 = vpack.c.bf16 %v426, %v425
    %v429 = vsel %vm94, %v427, 0
    %431 = vmatprep.subr.bf16.mxu0 0
    %432 = vmatpush1.bf16.msra.mxu0 %v228
    %433 = vmatprep.subr.bf16.mxu0 0
    %434 = vmatpush1.bf16.msra.mxu0 %v229
    %435 = vmatprep.subr.bf16.mxu0 0
    %436 = vmatpush1.bf16.msra.mxu0 0
    %437 = vmatprep.subr.bf16.mxu0 0
    %438 = vmatpush1.bf16.msra.mxu0 0
    %439 = vmatprep.subr.bf16.mxu0 0
    %440 = vmatpush1.bf16.msra.mxu0 0
    %441 = vmatprep.subr.bf16.mxu0 0
    %442 = vmatpush1.bf16.msra.mxu0 0
    %443 = vmatprep.subr.bf16.mxu0 0
    %444 = vmatpush1.bf16.msra.mxu0 0
    %445 = vmatprep.subr.bf16.mxu0 0
    %446 = vmatpush1.bf16.msra.mxu0 0
    %447 = vmatprep.subr.bf16.mxu0 0
    %448 = vmatpush1.bf16.msra.mxu0 0
    %449 = vmatprep.subr.bf16.mxu0 0
    %450 = vmatpush1.bf16.msra.mxu0 0
    %451 = vmatprep.subr.bf16.mxu0 0
    %452 = vmatpush1.bf16.msra.mxu0 0
    %453 = vmatprep.subr.bf16.mxu0 0
    %454 = vmatpush1.bf16.msra.mxu0 0
    %455 = vmatprep.subr.bf16.mxu0 0
    %456 = vmatpush1.bf16.msra.mxu0 0
    %457 = vmatprep.subr.bf16.mxu0 0
    %458 = vmatpush1.bf16.msra.mxu0 0
    %459 = vmatprep.subr.bf16.mxu0 0
    %460 = vmatpush1.bf16.msra.mxu0 0
    %461 = vmatprep.subr.bf16.mxu0 0
    %462 = vmatpush1.bf16.msra.mxu0 0
    %463 = vmatprep.mubr.bf16.mxu0 0
    %464 = vmatmul.mubr.bf16.gmra.mrb[0].mxu0 %v429
    %v465 = vpop.f32.mrb[0].mxu0
    %v466 = vadd.f32 0.0, %v465
    %v467 = vpop.f32.mrb[0].mxu0
    %v468 = vpop.f32.mrb[0].mxu0
    %v469 = vadd.f32 0.0, %v468
    %v470 = vpop.f32.mrb[0].mxu0
    %471 = vdwg.mxu0
    %v472 = vadd.f32 %v186, %v466
    %v473 = vadd.f32 %v189, %v469
    %v474 = vtanh.pop %v472
    %v475 = vtanh.pop %v473
    %v476 = vpack.c.bf16 %v475, %v474
    %v478 = vsel %vm94, %v476, 0
    %480 = vmatprep.subr.bf16.mxu0 0
    %481 = vmatpush1.bf16.msra.mxu0 %v228
    %482 = vmatprep.subr.bf16.mxu0 0
    %483 = vmatpush1.bf16.msra.mxu0 %v229
    %484 = vmatprep.subr.bf16.mxu0 0
    %485 = vmatpush1.bf16.msra.mxu0 0
    %486 = vmatprep.subr.bf16.mxu0 0
    %487 = vmatpush1.bf16.msra.mxu0 0
    %488 = vmatprep.subr.bf16.mxu0 0
    %489 = vmatpush1.bf16.msra.mxu0 0
    %490 = vmatprep.subr.bf16.mxu0 0
    %491 = vmatpush1.bf16.msra.mxu0 0
    %492 = vmatprep.subr.bf16.mxu0 0
    %493 = vmatpush1.bf16.msra.mxu0 0
    %494 = vmatprep.subr.bf16.mxu0 0
    %495 = vmatpush1.bf16.msra.mxu0 0
    %496 = vmatprep.subr.bf16.mxu0 0
    %497 = vmatpush1.bf16.msra.mxu0 0
    %498 = vmatprep.subr.bf16.mxu0 0
    %499 = vmatpush1.bf16.msra.mxu0 0
    %500 = vmatprep.subr.bf16.mxu0 0
    %501 = vmatpush1.bf16.msra.mxu0 0
    %502 = vmatprep.subr.bf16.mxu0 0
    %503 = vmatpush1.bf16.msra.mxu0 0
    %504 = vmatprep.subr.bf16.mxu0 0
    %505 = vmatpush1.bf16.msra.mxu0 0
    %506 = vmatprep.subr.bf16.mxu0 0
    %507 = vmatpush1.bf16.msra.mxu0 0
    %508 = vmatprep.subr.bf16.mxu0 0
    %509 = vmatpush1.bf16.msra.mxu0 0
    %510 = vmatprep.subr.bf16.mxu0 0
    %511 = vmatpush1.bf16.msra.mxu0 0
    %512 = vmatprep.mubr.bf16.mxu0 0
    %513 = vmatmul.mubr.bf16.gmra.mrb[0].mxu0 %v478
    %v514 = vpop.f32.mrb[0].mxu0
    %v515 = vadd.f32 0.0, %v514
    %v516 = vpop.f32.mrb[0].mxu0
    %v517 = vpop.f32.mrb[0].mxu0
    %v518 = vadd.f32 0.0, %v517
    %v519 = vpop.f32.mrb[0].mxu0
    %520 = vdwg.mxu0
    %v521 = vadd.f32 %v194, %v515
    %v522 = vadd.f32 %v197, %v518
    %v523 = vtanh.pop %v521
    %v524 = vtanh.pop %v522
    %v525 = vpack.c.bf16 %v524, %v523
    %v527 = vsel %vm94, %v525, 0
    %529 = vmatprep.subr.bf16.mxu0 0
    %530 = vmatpush1.bf16.msra.mxu0 %v228
    %531 = vmatprep.subr.bf16.mxu0 0
    %532 = vmatpush1.bf16.msra.mxu0 %v229
    %533 = vmatprep.subr.bf16.mxu0 0
    %534 = vmatpush1.bf16.msra.mxu0 0
    %535 = vmatprep.subr.bf16.mxu0 0
    %536 = vmatpush1.bf16.msra.mxu0 0
    %537 = vmatprep.subr.bf16.mxu0 0
    %538 = vmatpush1.bf16.msra.mxu0 0
    %539 = vmatprep.subr.bf16.mxu0 0
    %540 = vmatpush1.bf16.msra.mxu0 0
    %541 = vmatprep.subr.bf16.mxu0 0
    %542 = vmatpush1.bf16.msra.mxu0 0
    %543 = vmatprep.subr.bf16.mxu0 0
    %544 = vmatpush1.bf16.msra.mxu0 0
    %545 = vmatprep.subr.bf16.mxu0 0
    %546 = vmatpush1.bf16.msra.mxu0 0
    %547 = vmatprep.subr.bf16.mxu0 0
    %548 = vmatpush1.bf16.msra.mxu0 0
    %549 = vmatprep.subr.bf16.mxu0 0
    %550 = vmatpush1.bf16.msra.mxu0 0
    %551 = vmatprep.subr.bf16.mxu0 0
    %552 = vmatpush1.bf16.msra.mxu0 0
    %553 = vmatprep.subr.bf16.mxu0 0
    %554 = vmatpush1.bf16.msra.mxu0 0
    %555 = vmatprep.subr.bf16.mxu0 0
    %556 = vmatpush1.bf16.msra.mxu0 0
    %557 = vmatprep.subr.bf16.mxu0 0
    %558 = vmatpush1.bf16.msra.mxu0 0
    %559 = vmatprep.subr.bf16.mxu0 0
    %560 = vmatpush1.bf16.msra.mxu0 0
    %561 = vmatprep.mubr.bf16.mxu0 0
    %562 = vmatmul.mubr.bf16.gmra.mrb[0].mxu0 %v527
    %v563 = vpop.f32.mrb[0].mxu0
    %v564 = vadd.f32 0.0, %v563
    %v565 = vpop.f32.mrb[0].mxu0
    %v566 = vpop.f32.mrb[0].mxu0
    %v567 = vadd.f32 0.0, %v566
    %v568 = vpop.f32.mrb[0].mxu0
    %569 = vdwg.mxu0
    %v570 = vadd.f32 %v202, %v564
    %v571 = vadd.f32 %v205, %v567
    %v572 = vtanh.pop %v570
    %v573 = vtanh.pop %v571
    %v574 = vpack.c.bf16 %v573, %v572
    %v576 = vsel %vm94, %v574, 0
    %578 = vmatprep.subr.bf16.mxu0 0
    %579 = vmatpush1.bf16.msra.mxu0 %v228
    %580 = vmatprep.subr.bf16.mxu0 0
    %581 = vmatpush1.bf16.msra.mxu0 %v229
    %582 = vmatprep.subr.bf16.mxu0 0
    %583 = vmatpush1.bf16.msra.mxu0 0
    %584 = vmatprep.subr.bf16.mxu0 0
    %585 = vmatpush1.bf16.msra.mxu0 0
    %586 = vmatprep.subr.bf16.mxu0 0
    %587 = vmatpush1.bf16.msra.mxu0 0
    %588 = vmatprep.subr.bf16.mxu0 0
    %589 = vmatpush1.bf16.msra.mxu0 0
    %590 = vmatprep.subr.bf16.mxu0 0
    %591 = vmatpush1.bf16.msra.mxu0 0
    %592 = vmatprep.subr.bf16.mxu0 0
    %593 = vmatpush1.bf16.msra.mxu0 0
    %594 = vmatprep.subr.bf16.mxu0 0
    %595 = vmatpush1.bf16.msra.mxu0 0
    %596 = vmatprep.subr.bf16.mxu0 0
    %597 = vmatpush1.bf16.msra.mxu0 0
    %598 = vmatprep.subr.bf16.mxu0 0
    %599 = vmatpush1.bf16.msra.mxu0 0
    %600 = vmatprep.subr.bf16.mxu0 0
    %601 = vmatpush1.bf16.msra.mxu0 0
    %602 = vmatprep.subr.bf16.mxu0 0
    %603 = vmatpush1.bf16.msra.mxu0 0
    %604 = vmatprep.subr.bf16.mxu0 0
    %605 = vmatpush1.bf16.msra.mxu0 0
    %606 = vmatprep.subr.bf16.mxu0 0
    %607 = vmatpush1.bf16.msra.mxu0 0
    %608 = vmatprep.subr.bf16.mxu0 0
    %609 = vmatpush1.bf16.msra.mxu0 0
    %610 = vmatprep.mubr.bf16.mxu0 0
    %611 = vmatmul.mubr.bf16.gmra.mrb[0].mxu0 %v576
    %v612 = vpop.f32.mrb[0].mxu0
    %v613 = vadd.f32 0.0, %v612
    %v614 = vpop.f32.mrb[0].mxu0
    %v615 = vpop.f32.mrb[0].mxu0
    %v616 = vadd.f32 0.0, %v615
    %v617 = vpop.f32.mrb[0].mxu0
    %618 = vdwg.mxu0
    %v619 = vadd.f32 %v210, %v613
    %v620 = vadd.f32 %v213, %v616
    %v621 = vtanh.pop %v619
    %v622 = vtanh.pop %v620
    %v623 = vpack.c.bf16 %v622, %v621
    %v624 = vld [vmem:[%s3] sm:$0xf]
    %v625 = vld [vmem:[%s3 + $0x4] sm:$0xf]
    %v626 = vld [vmem:[%s3 + $0x8] sm:$0xf]
    %v627 = vld [vmem:[%s3 + $0xc] sm:$0xf]
    %v628 = vld [vmem:[%s4] sm:$0x1]
    %v630 = vlaneseq
    %v631 = vshrl.u32 %v630, 7
    %v632 = vsub.s32 0, %v631
    %v633 = vrot.slane %v628, %v632
    %v639 = vunpack.c.l.b16 %v624
    %v640 = vunpack.c.l.b16 %v625
    %v641 = vunpack.c.l.b16 %v626
    %v642 = vunpack.c.l.b16 %v627
    %v643 = vpack.c.b16 %v640, %v639
    %v644 = vpack.c.b16 %v642, %v641
    %v648 = vsel %vm94, %v623, 0
    %650 = vmatprep.subr.bf16.mxu0 0
    %651 = vmatpush1.bf16.msra.mxu0 %v643
    %652 = vmatprep.subr.bf16.mxu0 0
    %653 = vmatpush1.bf16.msra.mxu0 %v644
    %654 = vmatprep.subr.bf16.mxu0 0
    %655 = vmatpush1.bf16.msra.mxu0 0
    %656 = vmatprep.subr.bf16.mxu0 0
    %657 = vmatpush1.bf16.msra.mxu0 0
    %658 = vmatprep.subr.bf16.mxu0 0
    %659 = vmatpush1.bf16.msra.mxu0 0
    %660 = vmatprep.subr.bf16.mxu0 0
    %661 = vmatpush1.bf16.msra.mxu0 0
    %662 = vmatprep.subr.bf16.mxu0 0
    %663 = vmatpush1.bf16.msra.mxu0 0
    %664 = vmatprep.subr.bf16.mxu0 0
    %665 = vmatpush1.bf16.msra.mxu0 0
    %666 = vmatprep.subr.bf16.mxu0 0
    %667 = vmatpush1.bf16.msra.mxu0 0
    %668 = vmatprep.subr.bf16.mxu0 0
    %669 = vmatpush1.bf16.msra.mxu0 0
    %670 = vmatprep.subr.bf16.mxu0 0
    %671 = vmatpush1.bf16.msra.mxu0 0
    %672 = vmatprep.subr.bf16.mxu0 0
    %673 = vmatpush1.bf16.msra.mxu0 0
    %674 = vmatprep.subr.bf16.mxu0 0
    %675 = vmatpush1.bf16.msra.mxu0 0
    %676 = vmatprep.subr.bf16.mxu0 0
    %677 = vmatpush1.bf16.msra.mxu0 0
    %678 = vmatprep.subr.bf16.mxu0 0
    %679 = vmatpush1.bf16.msra.mxu0 0
    %680 = vmatprep.subr.bf16.mxu0 0
    %681 = vmatpush1.bf16.msra.mxu0 0
    %682 = vmatprep.mubr.bf16.mxu0 0
    %683 = vmatmul.mubr.bf16.gmra.mrb[0].mxu0 %v648
    %v684 = vpop.f32.mrb[0].mxu0
    %v685 = vadd.f32 %v633, %v684
    %v686 = vpop.f32.mrb[0].mxu0
    %v687 = vpop.f32.mrb[0].mxu0
    %v688 = vadd.f32 %v633, %v687
    %v689 = vpop.f32.mrb[0].mxu0
    %690 = vdwg.mxu0
    %691 = vmax.xlane.f32.xlu0 %v685
    %v692 = vpop.xlane.xlu0 %691
    %693 = vmax.xlane.f32.xlu0 %v688
    %v694 = vpop.xlane.xlu0 %693
    %v695 = vsub.f32 %v685, %v692
    %v696 = vsub.f32 %v688, %v694
    %v697 = vmul.f32 %v695, 1.442695
    %v698 = vpow.pop %v697
    %v699 = vmul.f32 %v696, 1.442695
    %v700 = vpow.pop %v699
    %701 = vadd.xlane.f32.xlu0 %v698
    %v702 = vpop.xlane.xlu0 %701
    %703 = vadd.xlane.f32.xlu0 %v700
    %v704 = vpop.xlane.xlu0 %703
    %v705 = vlog2.pop %v702
    %v706 = vmul.f32 %v705, 0.6931472
    %v707 = vlog2.pop %v704
    %v708 = vmul.f32 %v707, 0.6931472
    %v709 = vadd.f32 %v706, %v692
    %v710 = vadd.f32 %v708, %v694
    %v711 = vsub.f32 %v685, %v709
    %v712 = vsub.f32 %v688, %v710
    %713 = vst [vmem:[#allocation2] sm:$0xff] %v711
    %714 = vst [vmem:[#allocation2 + $0x8] sm:$0xff] %v712
    // Predicated region
    $region22: #{tpu_custom_call.1} parent=1 // pred_check
      _
    $region23: #{tpu_custom_call.1} parent=1 // pred_check_branch
      %716 = sbr.rel (0) target = $region25
    $region24: #{tpu_custom_call.1} parent=1 // pred_region
      %s718 = ssub.s32 256, 256
      %719 = vsyncadd [#allocation3], %s718
      %s720 = sshll.u32 [#allocation2], 4
      %s721 = int_to_ptr.vmem [resolvable:$true] %s720
      %726 = dma.vmem_to_hbm [thread:$0]  %s721, 256, %s5, [#allocation3], 128, 128, 8
    $region25: #{tpu_custom_call.1} parent=1 // pred_fallthru
      _
    // Predicated region
    $region26: #{tpu_custom_call.1} parent=1 // pred_check
      _
    $region27: #{tpu_custom_call.1} parent=1 // pred_check_branch
      %728 = sbr.rel (0) target = $region29
    $region28: #{tpu_custom_call.1} parent=1 // pred_region
      %729 = dma.done [#allocation3], 256
    $region29: #{tpu_custom_call.1} parent=1 // pred_fallthru
      _
    %730 = vsyncpa [#allocation3], 1

</llo_original>
